<compile_context>
chip_gen: v5e
topology: v5e:2x2
jax: 0.10.0
libtpu: 0.0.40
codegen_flags: <defaults>
</compile_context>

<pallas_src>
import functools

import jax
import jax.numpy as jnp
from jax import lax
from jax.experimental import pallas as pl
from jax.experimental.pallas import tpu as pltpu

_LANES = 128
_SUB_ROWS = 512  # rows per in-kernel sub-chunk (keeps live f32 temporaries small)


def _device_kind() -> str:
    try:
        return jax.devices()[0].device_kind.lower()
    except Exception:
        return ""


_KIND = _device_kind()
_IS_V7X = ("v7" in _KIND) or ("tpu7" in _KIND.replace(" ", ""))
_IS_V6_PLUS = _IS_V7X or ("v6" in _KIND) or ("trillium" in _KIND)
# 2048 rows -> 1 MiB per f32 input block (safe under v5e's 16 MiB scoped VMEM);
# 4096 rows -> 2 MiB per block on v6e / v7x (32 MiB scoped VMEM).
_MAX_BLOCK_ROWS = 4096 if _IS_V6_PLUS else 2048


def _dice_bce_kernel(x_ref, t_ref, out_ref, acc_i, acc_pt, acc_b, *,
                     blocks_per_split, block_rows, sub_rows, valid_rows,
                     needs_mask):
    """Streaming partial-sum kernel.

    Resident VMEM accumulators (one per split / core):
      acc_i  : sum sigmoid(x) * t      (dice intersection)
      acc_pt : sum sigmoid(x) + t      (dice denominator, sans smooth)
      acc_b  : sum BCE(sigmoid(x), t)
    out_ref : (1, 3, 128) per-split sublane-reduced partial sums.
    """
    i = pl.program_id(1)

    @pl.when(i == 0)
    def _init():
        acc_i[...] = jnp.zeros_like(acc_i)
        acc_pt[...] = jnp.zeros_like(acc_pt)
        acc_b[...] = jnp.zeros_like(acc_b)

    block_base = (pl.program_id(0) * blocks_per_split + i) * block_rows

    def fold(v):
        # (sub_rows, 128) -> (8, 128): sublane-tile-aligned VPU adds only; the
        # cross-lane/sublane reduction is deferred to the epilogue.
        return jnp.sum(v.reshape(sub_rows // 8, 8, _LANES), axis=0)

    def accumulate(x_raw, t_raw, row0, mask):
        x = x_raw.astype(jnp.float32)
        t = t_raw.astype(jnp.float32)
        if mask:
            # Rows past the true row count come from the padded region of a
            # partial block (unspecified data) -- neutralize them.
            ridx = lax.broadcasted_iota(jnp.int32, x.shape, 0) + row0
            ok = ridx < valid_rows
            x = jnp.where(ok, x, jnp.float32(-100.0))
            t = jnp.where(ok, t, jnp.float32(0.0))
        # Clamping x to [-100, 100] reproduces torch's -100 clamp of the BCE
        # log terms (sigmoid saturates far inside that range).
        x = jnp.clip(x, -100.0, 100.0)
        neg_abs = jnp.minimum(x, -x)                    # -|x|
        sp = jnp.log1p(jnp.exp(neg_abs))                # softplus(-|x|)  (EUP)
        p = jnp.exp(jnp.minimum(x, 0.0) - sp)           # sigmoid(x), no divide
        # BCE-with-logits identity:  max(x, 0) - t*x + softplus(-|x|).
        bce = jnp.maximum(x, 0.0) - t * x + sp

        acc_i[...] += fold(p * t)
        acc_pt[...] += fold(p + t)
        acc_b[...] += fold(bce)

    def process_chunk(r0):
        x_raw = x_ref[pl.ds(r0, sub_rows), :]
        t_raw = t_ref[pl.ds(r0, sub_rows), :]
        row0 = block_base + r0
        if needs_mask:
            # Only the chunk that straddles the end of the data pays for the
            # masking selects; all dense chunks take the cheap path.
            is_tail = row0 + sub_rows > valid_rows

            @pl.when(is_tail)
            def _masked():
                accumulate(x_raw, t_raw, row0, mask=True)

            @pl.when(jnp.logical_not(is_tail))
            def _dense():
                accumulate(x_raw, t_raw, row0, mask=False)
        else:
            accumulate(x_raw, t_raw, row0, mask=False)

    n_sub = block_rows // sub_rows
    if n_sub == 1:
        process_chunk(0)
    else:
        @pl.loop(0, n_sub)
        def _chunks(j):
            process_chunk(pl.multiple_of(j * sub_rows, sub_rows))

    @pl.when(i == blocks_per_split - 1)
    def _finalize():
        # Cross-sublane reduce on the (otherwise idle) XLU; the remaining
        # 3x128 lane reduce fuses into the scalar combine outside the kernel.
        out_ref[0, 0:1, :] = jnp.sum(acc_i[...], axis=0, keepdims=True)
        out_ref[0, 1:2, :] = jnp.sum(acc_pt[...], axis=0, keepdims=True)
        out_ref[0, 2:3, :] = jnp.sum(acc_b[...], axis=0, keepdims=True)


@functools.partial(jax.jit, static_argnames=("smooth",))
def dice_bce_loss(inputs, targets, smooth=1.0):
    """Pallas implementation of DiceBCELoss.forward(inputs, targets, smooth)."""
    n_elems = inputs.size

    # Sublane tile of the narrowest input dtype (f32 -> 8, bf16 -> 16, i8 -> 32).
    tile = max(8,
               32 // jnp.dtype(inputs.dtype).itemsize,
               32 // jnp.dtype(targets.dtype).itemsize)

    rows = pl.cdiv(pl.cdiv(n_elems, _LANES), tile) * tile
    padded_elems = rows * _LANES

    x_flat = inputs.reshape(-1)
    t_flat = targets.reshape(-1)
    if padded_elems != n_elems:
        # Fallback for lane/tile-misaligned sizes only: pad logits with -100
        # (sigmoid ~ 0, BCE ~ 0 against a 0 target), targets with 0.  In the
        # common aligned case there is no extra HBM copy at all.
        pad = padded_elems - n_elems
        x_flat = jnp.pad(x_flat, (0, pad), constant_values=-100.0)
        t_flat = jnp.pad(t_flat, (0, pad))
    x2 = x_flat.reshape(rows, _LANES)   # metadata-only reshape when aligned
    t2 = t_flat.reshape(rows, _LANES)

    block_rows = min(_MAX_BLOCK_ROWS, rows)
    sub_rows = _SUB_ROWS if block_rows % _SUB_ROWS == 0 else block_rows

    # Two-core split only on v7x and only when there is enough work.
    num_splits = 2 if (_IS_V7X and rows >= 2 * block_rows) else 1
    blocks_per_split = pl.cdiv(rows, block_rows * num_splits)
    if num_splits == 2 and (2 * blocks_per_split - 1) * block_rows >= rows:
        # Would create a block that lies entirely past the end of the data.
        num_splits = 1
        blocks_per_split = pl.cdiv(rows, block_rows)
    needs_mask = num_splits * blocks_per_split * block_rows != rows

    kernel = functools.partial(
        _dice_bce_kernel,
        blocks_per_split=blocks_per_split,
        block_rows=block_rows,
        sub_rows=sub_rows,
        valid_rows=rows,
        needs_mask=needs_mask,
    )

    in_spec = pl.BlockSpec(
        (block_rows, _LANES), lambda c, i: (c * blocks_per_split + i, 0)
    )
    out_spec = pl.BlockSpec((1, 3, _LANES), lambda c, i: (c, 0, 0))

    partials = pl.pallas_call(
        kernel,
        out_shape=jax.ShapeDtypeStruct((num_splits, 3, _LANES), jnp.float32),
        grid_spec=pltpu.PrefetchScalarGridSpec(
            num_scalar_prefetch=0,
            grid=(num_splits, blocks_per_split),
            in_specs=[in_spec, in_spec],
            out_specs=out_spec,
            scratch_shapes=[pltpu.VMEM((8, _LANES), jnp.float32)] * 3,
        ),
        compiler_params=pltpu.CompilerParams(
            dimension_semantics=("parallel", "arbitrary"),
        ),
    )(x2, t2)

    # Tiny lane reduce + scalar combine (fused into one small XLA op).
    sums = jnp.sum(partials, axis=(0, 2))                 # (3,)
    intersection, pt_sum, bce_sum = sums[0], sums[1], sums[2]

    dice_loss = 1.0 - (2.0 * intersection + smooth) / (pt_sum + smooth)
    bce = bce_sum / jnp.float32(n_elems)                  # mean over TRUE count
    return bce + dice_loss


if __name__ == "__main__":
    def reference(inputs, targets, smooth=1.0):
        # Pure-JAX reference mirroring the PyTorch module (prob-space BCE with
        # torch's -100 log clamp).
        p = jax.nn.sigmoid(inputs.astype(jnp.float32)).reshape(-1)
        t = targets.astype(jnp.float32).reshape(-1)
        inter = jnp.sum(p * t)
        dice = 1.0 - (2.0 * inter + smooth) / (jnp.sum(p) + jnp.sum(t) + smooth)
        bce = jnp.mean(-(t * jnp.maximum(jnp.log(p), -100.0)
                         + (1.0 - t) * jnp.maximum(jnp.log(1.0 - p), -100.0)))
        return bce + dice

    key = jax.random.PRNGKey(0)
    k1, k2, k3, k4, k5, k6, k7, k8 = jax.random.split(key, 8)

    # 1) Small NCHW logits/targets (canonical segmentation-loss shapes).
    x_small = jax.random.normal(k1, (2, 4, 16, 16), dtype=jnp.float32)
    t_small = jax.random.bernoulli(k2, p=0.5, shape=(2, 4, 16, 16)).astype(jnp.float32)
    loss = dice_bce_loss(x_small, t_small, smooth=1.0)
    jax.block_until_ready(loss)
    ref = reference(x_small, t_small)
    assert jnp.allclose(loss, ref, atol=1e-4, rtol=1e-4), (loss, ref)

    # 2) Block-misaligned case: multi-block grid, in-kernel sub-chunk loop and
    #    partial-block tail masking.
    x_big = jax.random.normal(k3, (2, 4, 260, 256), dtype=jnp.float32)
    t_big = jax.random.bernoulli(k4, p=0.3, shape=(2, 4, 260, 256)).astype(jnp.float32)
    loss_big = dice_bce_loss(x_big, t_big, smooth=1.0)
    ref_big = reference(x_big, t_big)
    assert jnp.allclose(loss_big, ref_big, atol=1e-4, rtol=1e-4), (loss_big, ref_big)

    # 3) Larger aligned case (also exercises the two-core split on v7x).
    x_par = jax.random.normal(k5, (2, 4, 512, 512), dtype=jnp.float32)
    t_par = jax.random.bernoulli(k6, p=0.4, shape=(2, 4, 512, 512)).astype(jnp.float32)
    loss_par = dice_bce_loss(x_par, t_par, smooth=1.0)
    ref_par = reference(x_par, t_par)
    assert jnp.allclose(loss_par, ref_par, atol=1e-4, rtol=1e-4), (loss_par, ref_par)

    # 4) bf16 logits, lane-misaligned size (pad fallback path).
    x_bf = jax.random.normal(k7, (2, 3, 7, 11), dtype=jnp.bfloat16)
    t_bf = jax.random.bernoulli(k8, p=0.5, shape=(2, 3, 7, 11)).astype(jnp.float32)
    loss_bf = dice_bce_loss(x_bf, t_bf, smooth=1.0)
    ref_bf = reference(x_bf, t_bf)
    assert jnp.allclose(loss_bf, ref_bf, atol=1e-4, rtol=1e-4), (loss_bf, ref_bf)

    print("KERNEL_OK")
</pallas_src>

<mosaic_0001>
module attributes {stable_mosaic.version = 11 : i64} {
  func.func @_dice_bce_kernel(%arg0: i32, %arg1: i32, %arg2: memref<16x128xf32, #tpu.memory_space<vmem>>, %arg3: memref<16x128xf32, #tpu.memory_space<vmem>>, %arg4: memref<1x3x128xf32, #tpu.memory_space<vmem>>, %arg5: memref<8x128xf32, #tpu.memory_space<vmem>>, %arg6: memref<8x128xf32, #tpu.memory_space<vmem>>, %arg7: memref<8x128xf32, #tpu.memory_space<vmem>>) attributes {dimension_semantics = [#tpu.dimension_semantics<parallel>, #tpu.dimension_semantics<arbitrary>], iteration_bounds = array<i64: 1, 1>, scalar_prefetch = 0 : i64, scratch_operands = 3 : i64, tpu.core_type = #tpu.core_type<tc>, window_params = [{transform_indices = @transform_0, window_bounds = array<i64: 16, 128>}, {transform_indices = @transform_1, window_bounds = array<i64: 16, 128>}, {transform_indices = @transform_2, window_bounds = array<i64: 1, 3, 128>}]} {
    %c0_i32 = arith.constant 0 : i32
    %0 = arith.cmpi eq, %arg1, %c0_i32 : i32
    %1 = arith.extui %0 : i1 to i32
    %c0_i32_0 = arith.constant 0 : i32
    %2 = arith.cmpi ne, %1, %c0_i32_0 : i32
    scf.if %2 {
      %cst_25 = arith.constant 0.000000e+00 : f32
      %43 = vector.broadcast %cst_25 : f32 to vector<8x128xf32>
      %c0_26 = arith.constant 0 : index
      %c0_27 = arith.constant 0 : index
      %44 = vector.load %arg5[%c0_26, %c0_27] : memref<8x128xf32, #tpu.memory_space<vmem>>, vector<8x128xf32>
      tpu.vector_store %arg5[%c0_26, %c0_27], %43 {strides = array<i32>} : memref<8x128xf32, #tpu.memory_space<vmem>>, vector<8x128xf32>,
      %cst_28 = arith.constant 0.000000e+00 : f32
      %45 = vector.broadcast %cst_28 : f32 to vector<8x128xf32>
      %c0_29 = arith.constant 0 : index
      %c0_30 = arith.constant 0 : index
      %46 = vector.load %arg6[%c0_29, %c0_30] : memref<8x128xf32, #tpu.memory_space<vmem>>, vector<8x128xf32>
      tpu.vector_store %arg6[%c0_29, %c0_30], %45 {strides = array<i32>} : memref<8x128xf32, #tpu.memory_space<vmem>>, vector<8x128xf32>,
      %cst_31 = arith.constant 0.000000e+00 : f32
      %47 = vector.broadcast %cst_31 : f32 to vector<8x128xf32>
      %c0_32 = arith.constant 0 : index
      %c0_33 = arith.constant 0 : index
      %48 = vector.load %arg7[%c0_32, %c0_33] : memref<8x128xf32, #tpu.memory_space<vmem>>, vector<8x128xf32>
      tpu.vector_store %arg7[%c0_32, %c0_33], %47 {strides = array<i32>} : memref<8x128xf32, #tpu.memory_space<vmem>>, vector<8x128xf32>,
    } else {
    }
    %c0 = arith.constant 0 : index
    %c0_1 = arith.constant 0 : index
    %3 = vector.load %arg2[%c0, %c0_1] : memref<16x128xf32, #tpu.memory_space<vmem>>, vector<16x128xf32>
    %c0_2 = arith.constant 0 : index
    %c0_3 = arith.constant 0 : index
    %4 = vector.load %arg3[%c0_2, %c0_3] : memref<16x128xf32, #tpu.memory_space<vmem>>, vector<16x128xf32>
    %cst = arith.constant -1.000000e+02 : f32
    %cst_4 = arith.constant 1.000000e+02 : f32
    %5 = vector.broadcast %cst : f32 to vector<16x128xf32>
    %6 = arith.maximumf %5, %3 : vector<16x128xf32>
    %7 = vector.broadcast %cst_4 : f32 to vector<16x128xf32>
    %8 = arith.minimumf %7, %6 : vector<16x128xf32>
    %cst_5 = arith.constant 0.000000e+00 : f32
    %9 = vector.broadcast %cst_5 : f32 to vector<16x128xf32>
    %10 = arith.subf %9, %8 : vector<16x128xf32>
    %11 = arith.minimumf %8, %10 : vector<16x128xf32>
    %12 = math.exp %11 : vector<16x128xf32>
    %13 = math.log1p %12 : vector<16x128xf32>
    %cst_6 = arith.constant 0.000000e+00 : f32
    %14 = vector.broadcast %cst_6 : f32 to vector<16x128xf32>
    %15 = arith.minimumf %8, %14 : vector<16x128xf32>
    %16 = arith.subf %15, %13 : vector<16x128xf32>
    %17 = math.exp %16 : vector<16x128xf32>
    %cst_7 = arith.constant 0.000000e+00 : f32
    %18 = vector.broadcast %cst_7 : f32 to vector<16x128xf32>
    %19 = arith.maximumf %8, %18 : vector<16x128xf32>
    %20 = arith.mulf %4, %8 : vector<16x128xf32>
    %21 = arith.subf %19, %20 : vector<16x128xf32>
    %22 = arith.addf %21, %13 : vector<16x128xf32>
    %c0_8 = arith.constant 0 : index
    %c0_9 = arith.constant 0 : index
    %23 = vector.load %arg5[%c0_8, %c0_9] : memref<8x128xf32, #tpu.memory_space<vmem>>, vector<8x128xf32>
    %24 = arith.mulf %17, %4 : vector<16x128xf32>
    %25 = vector.shape_cast %24 : vector<16x128xf32> to vector<2x8x128xf32>
    %cst_10 = arith.constant dense<0.000000e+00> : vector<8x128xf32>
    %26 = vector.multi_reduction <add>, %25, %cst_10 [0] : vector<2x8x128xf32> to vector<8x128xf32>
    %27 = arith.addf %23, %26 : vector<8x128xf32>
    %c0_11 = arith.constant 0 : index
    %c0_12 = arith.constant 0 : index
    %28 = vector.load %arg5[%c0_11, %c0_12] : memref<8x128xf32, #tpu.memory_space<vmem>>, vector<8x128xf32>
    tpu.vector_store %arg5[%c0_11, %c0_12], %27 {strides = array<i32>} : memref<8x128xf32, #tpu.memory_space<vmem>>, vector<8x128xf32>,
    %c0_13 = arith.constant 0 : index
    %c0_14 = arith.constant 0 : index
    %29 = vector.load %arg6[%c0_13, %c0_14] : memref<8x128xf32, #tpu.memory_space<vmem>>, vector<8x128xf32>
    %30 = arith.addf %17, %4 : vector<16x128xf32>
    %31 = vector.shape_cast %30 : vector<16x128xf32> to vector<2x8x128xf32>
    %cst_15 = arith.constant dense<0.000000e+00> : vector<8x128xf32>
    %32 = vector.multi_reduction <add>, %31, %cst_15 [0] : vector<2x8x128xf32> to vector<8x128xf32>
    %33 = arith.addf %29, %32 : vector<8x128xf32>
    %c0_16 = arith.constant 0 : index
    %c0_17 = arith.constant 0 : index
    %34 = vector.load %arg6[%c0_16, %c0_17] : memref<8x128xf32, #tpu.memory_space<vmem>>, vector<8x128xf32>
    tpu.vector_store %arg6[%c0_16, %c0_17], %33 {strides = array<i32>} : memref<8x128xf32, #tpu.memory_space<vmem>>, vector<8x128xf32>,
    %c0_18 = arith.constant 0 : index
    %c0_19 = arith.constant 0 : index
    %35 = vector.load %arg7[%c0_18, %c0_19] : memref<8x128xf32, #tpu.memory_space<vmem>>, vector<8x128xf32>
    %36 = vector.shape_cast %22 : vector<16x128xf32> to vector<2x8x128xf32>
    %cst_20 = arith.constant dense<0.000000e+00> : vector<8x128xf32>
    %37 = vector.multi_reduction <add>, %36, %cst_20 [0] : vector<2x8x128xf32> to vector<8x128xf32>
    %38 = arith.addf %35, %37 : vector<8x128xf32>
    %c0_21 = arith.constant 0 : index
    %c0_22 = arith.constant 0 : index
    %39 = vector.load %arg7[%c0_21, %c0_22] : memref<8x128xf32, #tpu.memory_space<vmem>>, vector<8x128xf32>
    tpu.vector_store %arg7[%c0_21, %c0_22], %38 {strides = array<i32>} : memref<8x128xf32, #tpu.memory_space<vmem>>, vector<8x128xf32>,
    %c0_i32_23 = arith.constant 0 : i32
    %40 = arith.cmpi eq, %arg1, %c0_i32_23 : i32
    %41 = arith.extui %40 : i1 to i32
    %c0_i32_24 = arith.constant 0 : i32
    %42 = arith.cmpi ne, %41, %c0_i32_24 : i32
    scf.if %42 {
      %c0_25 = arith.constant 0 : index
      %c0_26 = arith.constant 0 : index
      %43 = vector.load %arg5[%c0_25, %c0_26] : memref<8x128xf32, #tpu.memory_space<vmem>>, vector<8x128xf32>
      %cst_27 = arith.constant dense<0.000000e+00> : vector<128xf32>
      %44 = vector.multi_reduction <add>, %43, %cst_27 [0] : vector<8x128xf32> to vector<128xf32>
      %45 = vector.shape_cast %44 : vector<128xf32> to vector<1x128xf32>
      %c0_28 = arith.constant 0 : index
      %c0_29 = arith.constant 0 : index
      %c0_30 = arith.constant 0 : index
      %46 = vector.load %arg4[%c0_28, %c0_29, %c0_30] : memref<1x3x128xf32, #tpu.memory_space<vmem>>, vector<1x1x128xf32>
      %47 = vector.shape_cast %46 : vector<1x1x128xf32> to vector<1x128xf32>
      %48 = vector.shape_cast %45 : vector<1x128xf32> to vector<1x1x128xf32>
      tpu.vector_store %arg4[%c0_28, %c0_29, %c0_30], %48 {strides = array<i32>} : memref<1x3x128xf32, #tpu.memory_space<vmem>>, vector<1x1x128xf32>,
      %c0_31 = arith.constant 0 : index
      %c0_32 = arith.constant 0 : index
      %49 = vector.load %arg6[%c0_31, %c0_32] : memref<8x128xf32, #tpu.memory_space<vmem>>, vector<8x128xf32>
      %cst_33 = arith.constant dense<0.000000e+00> : vector<128xf32>
      %50 = vector.multi_reduction <add>, %49, %cst_33 [0] : vector<8x128xf32> to vector<128xf32>
      %51 = vector.shape_cast %50 : vector<128xf32> to vector<1x128xf32>
      %c0_34 = arith.constant 0 : index
      %c1 = arith.constant 1 : index
      %c0_35 = arith.constant 0 : index
      %52 = vector.load %arg4[%c0_34, %c1, %c0_35] : memref<1x3x128xf32, #tpu.memory_space<vmem>>, vector<1x1x128xf32>
      %53 = vector.shape_cast %52 : vector<1x1x128xf32> to vector<1x128xf32>
      %54 = vector.shape_cast %51 : vector<1x128xf32> to vector<1x1x128xf32>
      tpu.vector_store %arg4[%c0_34, %c1, %c0_35], %54 {strides = array<i32>} : memref<1x3x128xf32, #tpu.memory_space<vmem>>, vector<1x1x128xf32>,
      %c0_36 = arith.constant 0 : index
      %c0_37 = arith.constant 0 : index
      %55 = vector.load %arg7[%c0_36, %c0_37] : memref<8x128xf32, #tpu.memory_space<vmem>>, vector<8x128xf32>
      %cst_38 = arith.constant dense<0.000000e+00> : vector<128xf32>
      %56 = vector.multi_reduction <add>, %55, %cst_38 [0] : vector<8x128xf32> to vector<128xf32>
      %57 = vector.shape_cast %56 : vector<128xf32> to vector<1x128xf32>
      %c0_39 = arith.constant 0 : index
      %c2 = arith.constant 2 : index
      %c0_40 = arith.constant 0 : index
      %58 = vector.load %arg4[%c0_39, %c2, %c0_40] : memref<1x3x128xf32, #tpu.memory_space<vmem>>, vector<1x1x128xf32>
      %59 = vector.shape_cast %58 : vector<1x1x128xf32> to vector<1x128xf32>
      %60 = vector.shape_cast %57 : vector<1x128xf32> to vector<1x1x128xf32>
      tpu.vector_store %arg4[%c0_39, %c2, %c0_40], %60 {strides = array<i32>} : memref<1x3x128xf32, #tpu.memory_space<vmem>>, vector<1x1x128xf32>,
    } else {
    }
    return
  }
  func.func @transform_0(%arg0: i32, %arg1: i32) -> (i32, i32) {
    %c1_i32 = arith.constant 1 : i32
    %0 = arith.muli %arg0, %c1_i32 : i32
    %1 = arith.addi %0, %arg1 : i32
    %c0_i32 = arith.constant 0 : i32
    %c0_i32_0 = arith.constant 0 : i32
    return %1, %c0_i32 : i32, i32
  }
  func.func @transform_1(%arg0: i32, %arg1: i32) -> (i32, i32) {
    %c1_i32 = arith.constant 1 : i32
    %0 = arith.muli %arg0, %c1_i32 : i32
    %1 = arith.addi %0, %arg1 : i32
    %c0_i32 = arith.constant 0 : i32
    %c0_i32_0 = arith.constant 0 : i32
    return %1, %c0_i32 : i32, i32
  }
  func.func @transform_2(%arg0: i32, %arg1: i32) -> (i32, i32, i32) {
    %c0_i32 = arith.constant 0 : i32
    %c0_i32_0 = arith.constant 0 : i32
    %c0_i32_1 = arith.constant 0 : i32
    return %arg0, %c0_i32, %c0_i32_0 : i32, i32, i32
  }
}

</mosaic_0001>

<llo_original>
// kernel: dice_bce_loss.1
$region0: #{dice_bce_loss.1}
  #allocation0 [shape = 'u32[]', space=smem, size = 0x4, offset = 0x4, fixed_abs, tag = 'smem constant byte address 0x4 - core index']
  #allocation1 [shape = 'u32[72,128]{1,0:T(1,128)}', space=vmem, size = 0x9000, scoped, tag = 'internal scratch']
  #allocation2 [shape = 'f32[8,128]{1,0:T(8,128)}', space=vmem, size = 0x1000, scoped, tag = 'scratch operand']
  #allocation3 [shape = 'f32[8,128]{1,0:T(8,128)}', space=vmem, size = 0x1000, scoped, tag = 'scratch operand']
  #allocation4 [shape = 'f32[8,128]{1,0:T(8,128)}', space=vmem, size = 0x1000, scoped, tag = 'scratch operand']
  %s0 = inlined_call_operand.vmem [shape: f32[16,128], index: 0, kind: input, shape index: {}]
  %s1 = inlined_call_operand.vmem [shape: f32[16,128], index: 1, kind: input, shape index: {}]
  %s2 = inlined_call_operand.vmem [shape: f32[1,3,128], index: 2, kind: output, shape index: {}]
  %s3 = sld [smem:[#allocation0]]
  $region26: #{dice_bce_loss.1} parent=0
    _
  %s5 = ssub.s32 1, %s3
  %s6 = scalar_select 0, %s5, %s3
  // Predicated region
  $region2: #{dice_bce_loss.1} parent=0 // pred_check
    _
  $region3: #{dice_bce_loss.1} parent=0 // pred_check_branch
    %8 = sbr.rel (0) target = $region5
  $region4: #{dice_bce_loss.1} parent=0 // pred_region
    %s9 = sadd.s32 0, 0
    %s10 = smul.u32 2, %s9
    %p11 = scmp.lt.s32.totalorder %s10, 1
    %s12 = scalar_select %p11, %s10, 1
    %s13 = smul.addr %s12, 8
    %s14 = scalar_lea.vmem %s0, %s13
    %s15 = sadd.s32 0, 0
    %s16 = smul.u32 2, %s15
  $region5: #{dice_bce_loss.1} parent=0 // pred_fallthru
    _
  // Predicated region
  $region6: #{dice_bce_loss.1} parent=0 // pred_check
    _
  $region7: #{dice_bce_loss.1} parent=0 // pred_check_branch
    %18 = sbr.rel (0) target = $region9
  $region8: #{dice_bce_loss.1} parent=0 // pred_region
    %s19 = sadd.s32 0, 0
    %s20 = smul.u32 2, %s19
    %p21 = scmp.lt.s32.totalorder %s20, 1
    %s22 = scalar_select %p21, %s20, 1
    %s23 = smul.addr %s22, 8
    %s24 = scalar_lea.vmem %s1, %s23
    %s25 = sadd.s32 0, 0
    %s26 = smul.u32 2, %s25
  $region9: #{dice_bce_loss.1} parent=0 // pred_fallthru
    _
  %s27 = sadd.s32 0, 0
  %s28 = smul.u32 2, %s27
  %p29 = scmp.lt.s32.totalorder %s28, 1
  %s30 = scalar_select %p29, %s28, 1
  %s31 = smul.addr %s30, 8
  %s32 = scalar_lea.vmem %s0, %s31
  %s33 = sadd.s32 0, 0
  %s34 = smul.u32 2, %s33
  %p35 = scmp.lt.s32.totalorder %s34, 1
  %s36 = scalar_select %p35, %s34, 1
  %s37 = smul.addr %s36, 8
  %s38 = scalar_lea.vmem %s1, %s37
  %s39 = sadd.s32 0, 0
  %s40 = smul.u32 2, %s39
  %p41 = scmp.lt.s32.totalorder %s40, 1
  %s42 = scalar_select %p41, %s40, 1
  %s43 = smul.addr %s42, 8
  %s44 = scalar_lea.vmem %s0, %s43
  %s45 = sadd.s32 0, 0
  %s46 = smul.u32 2, %s45
  %s47 = sadd.s32 0, 0
  %s48 = smul.u32 2, %s47
  %p49 = scmp.lt.s32.totalorder %s48, 1
  %s50 = scalar_select %p49, %s48, 1
  %s51 = smul.addr %s50, 8
  %s52 = scalar_lea.vmem %s1, %s51
  %s53 = sadd.s32 0, 0
  %s54 = smul.u32 2, %s53
  %p55 = scmp.eq.s32.totalorder 0, 0
  // Predicated region
  $region10: #{dice_bce_loss.1} parent=0 // pred_check
    %p56 = pneg %p55
  $region11: #{dice_bce_loss.1} parent=0 // pred_check_branch
    %58 = sbr.rel (%p56) target = $region13
  $region12: #{dice_bce_loss.1} parent=0 // pred_region
    %59 = vst [vmem:[#allocation2] sm:$0xff] 0.0
    %60 = vst [vmem:[#allocation3] sm:$0xff] 0.0
    %61 = vst [vmem:[#allocation4] sm:$0xff] 0.0
  $region13: #{dice_bce_loss.1} parent=0 // pred_fallthru
    _
  %v62 = vld [vmem:[%s44] sm:$0xff]
  %v63 = vld [vmem:[%s44 + $0x8] sm:$0xff]
  %v64 = vld [vmem:[%s52] sm:$0xff]
  %v65 = vld [vmem:[%s52 + $0x8] sm:$0xff]
  %v66 = vmax.f32 %v62, -100.0
  %v67 = vmax.f32 %v63, -100.0
  %v68 = vmin.f32 %v66, 100.0
  %v69 = vmin.f32 %v67, 100.0
  %v70 = vsub.f32 0.0, %v68
  %v71 = vsub.f32 0.0, %v69
  %v72 = vmin.f32 %v68, %v70
  %v73 = vmin.f32 %v69, %v71
  %v74 = vmul.f32 %v72, 1.442695
  %v75 = vpow.pop %v74
  %v76 = vmul.f32 %v73, 1.442695
  %v77 = vpow.pop %v76
  %v78 = vadd.f32 %v75, 1.0
  %v79 = vlog2.pop %v78
  %v80 = vmul.f32 %v79, 0.6931472
  %v81 = vmul.f32 -0.5, %v75
  %v82 = vadd.f32 %v81, 1.0
  %v83 = vmul.f32 %v82, %v75
  %v84 = vand.u32 2147483647, %v75
  %vm85 = vcmp.lt.f32.partialorder %v84, 0.0004427343
  %v86 = vsel %vm85, %v83, %v80
  %v87 = vadd.f32 %v77, 1.0
  %v88 = vlog2.pop %v87
  %v89 = vmul.f32 %v88, 0.6931472
  %v90 = vmul.f32 -0.5, %v77
  %v91 = vadd.f32 %v90, 1.0
  %v92 = vmul.f32 %v91, %v77
  %v93 = vand.u32 2147483647, %v77
  %vm94 = vcmp.lt.f32.partialorder %v93, 0.0004427343
  %v95 = vsel %vm94, %v92, %v89
  %v96 = vmin.f32 %v68, 0.0
  %v97 = vmin.f32 %v69, 0.0
  %v98 = vsub.f32 %v96, %v86
  %v99 = vsub.f32 %v97, %v95
  %v100 = vmul.f32 %v98, 1.442695
  %v101 = vpow.pop %v100
  %v102 = vmul.f32 %v99, 1.442695
  %v103 = vpow.pop %v102
  %v104 = vmax.f32 %v68, 0.0
  %v105 = vmax.f32 %v69, 0.0
  %v106 = vmul.f32 %v64, %v68
  %v107 = vmul.f32 %v65, %v69
  %v108 = vsub.f32 %v104, %v106
  %v109 = vsub.f32 %v105, %v107
  %v110 = vadd.f32 %v108, %v86
  %v111 = vadd.f32 %v109, %v95
  %v112 = vld [vmem:[#allocation2] sm:$0xff]
  %v113 = vmul.f32 %v101, %v64
  %v114 = vmul.f32 %v103, %v65
  %v115 = vadd.f32 %v113, %v114
  %v116 = vadd.f32 %v112, %v115
  %117 = vst [vmem:[#allocation2] sm:$0xff] %v116
  %v118 = vld [vmem:[#allocation3] sm:$0xff]
  %v119 = vadd.f32 %v101, %v64
  %v120 = vadd.f32 %v103, %v65
  %v121 = vadd.f32 %v119, %v120
  %v122 = vadd.f32 %v118, %v121
  %123 = vst [vmem:[#allocation3] sm:$0xff] %v122
  %v124 = vld [vmem:[#allocation4] sm:$0xff]
  %v125 = vadd.f32 %v110, %v111
  %v126 = vadd.f32 %v124, %v125
  %127 = vst [vmem:[#allocation4] sm:$0xff] %v126
  // Predicated region
  $region14: #{dice_bce_loss.1} parent=0 // pred_check
    %p128 = pneg %p55
  $region15: #{dice_bce_loss.1} parent=0 // pred_check_branch
    %130 = sbr.rel (%p128) target = $region17
  $region16: #{dice_bce_loss.1} parent=0 // pred_region
    %v131 = vld [vmem:[#allocation2] sm:$0xff]
    %v132 = vrot.slane %v131, 4
    %v133 = vadd.f32 %v131, %v132
    %v134 = vrot.slane %v133, 2
    %v135 = vadd.f32 %v133, %v134
    %v136 = vrot.slane %v135, 1
    %v137 = vadd.f32 %v135, %v136
    %138 = vst [vmem:[%s2] sm:$0x1] %v137
    %v139 = vld [vmem:[#allocation3] sm:$0xff]
    %v140 = vrot.slane %v139, 4
    %v141 = vadd.f32 %v139, %v140
    %v142 = vrot.slane %v141, 2
    %v143 = vadd.f32 %v141, %v142
    %v144 = vrot.slane %v143, 1
    %v145 = vadd.f32 %v143, %v144
    %146 = vst [vmem:[%s2 + $0x1] sm:$0x1] %v145
    %v147 = vld [vmem:[#allocation4] sm:$0xff]
    %v148 = vrot.slane %v147, 4
    %v149 = vadd.f32 %v147, %v148
    %v150 = vrot.slane %v149, 2
    %v151 = vadd.f32 %v149, %v150
    %v152 = vrot.slane %v151, 1
    %v153 = vadd.f32 %v151, %v152
    %154 = vst [vmem:[%s2 + $0x2] sm:$0x1] %v153
  $region17: #{dice_bce_loss.1} parent=0 // pred_fallthru
    _
  // Predicated region
  $region18: #{dice_bce_loss.1} parent=0 // pred_check
    _
  $region19: #{dice_bce_loss.1} parent=0 // pred_check_branch
    %156 = sbr.rel (0) target = $region21
  $region20: #{dice_bce_loss.1} parent=0 // pred_region
    _
  $region21: #{dice_bce_loss.1} parent=0 // pred_fallthru
    _
  // Predicated region
  $region22: #{dice_bce_loss.1} parent=0 // pred_check
    _
  $region23: #{dice_bce_loss.1} parent=0 // pred_check_branch
    %158 = sbr.rel (0) target = $region25
  $region24: #{dice_bce_loss.1} parent=0 // pred_region
    _
  $region25: #{dice_bce_loss.1} parent=0 // pred_fallthru
    _

</llo_original>
